<compile_context>
chip_gen: v5e
topology: v5e:2x2
jax: 0.10.0
libtpu: 0.0.40
codegen_flags: <defaults>
</compile_context>

<pallas_src>
import functools

import jax
import jax.numpy as jnp
from jax.experimental import pallas as pl
from jax.experimental.pallas import tpu as pltpu


# ---------------------------------------------------------------------------
# Pallas kernel: full MHA for one batch element.
# ---------------------------------------------------------------------------
def mha_kernel(
    q_ref,      # [Lq, E] queries (batch dim squeezed)
    k_ref,      # [Lk, E] keys
    v_ref,      # [Lk, E] values
    wq_ref,     # [D, D]  Q projection (right-multiply, pre-scaled by sqrt(Lk))
    wk_ref,     # [D, D]  K projection (right-multiply)
    wv_ref,     # [D, D]  V projection (right-multiply)
    wfc_ref,    # [E, E]  output projection (right-multiply)
    bfc_ref,    # [1, E]  output projection bias
    o_ref,      # [Lq, E] output
    *,
    n_heads: int,
    head_dim: int,
):
    xq = q_ref[...]                       # [Lq, E]
    xk = k_ref[...]                       # [Lk, E]
    xv = v_ref[...]                       # [Lk, E]
    wq_t = wq_ref[...]                    # [D, D] (sqrt(Lk) scale folded in)
    wk_t = wk_ref[...]
    wv_t = wv_ref[...]
    wfc_t = wfc_ref[...]                  # [E, E]

    Lq, E = xq.shape

    # Accumulator starts at the fc bias (broadcast over rows) -> the final
    # store needs no extra bias add.
    acc = jnp.broadcast_to(bfc_ref[...].astype(jnp.float32), (Lq, E))

    # Small static loop over heads; every slice below is static.
    for h in range(n_heads):
        lo = h * head_dim
        hi = lo + head_dim
        qh = jnp.dot(xq[:, lo:hi], wq_t, preferred_element_type=jnp.float32)  # [Lq, D]
        kh = jnp.dot(xk[:, lo:hi], wk_t, preferred_element_type=jnp.float32)  # [Lk, D]
        vh = jnp.dot(xv[:, lo:hi], wv_t, preferred_element_type=jnp.float32)  # [Lk, D]

        s = jnp.dot(qh, kh.T, preferred_element_type=jnp.float32)             # [Lq, Lk]
        s = s - jnp.max(s, axis=-1, keepdims=True)                            # safe softmax
        p = jnp.exp(s)
        p = p * pl.reciprocal(jnp.sum(p, axis=-1, keepdims=True), approx=True)

        oh = jnp.dot(p, vh, preferred_element_type=jnp.float32)               # [Lq, D]
        # fc fused per head: out += oh @ WfcT[hD:(h+1)D, :]
        acc = acc + jnp.dot(oh, wfc_t[lo:hi, :], preferred_element_type=jnp.float32)

    o_ref[...] = acc.astype(o_ref.dtype)


# ---------------------------------------------------------------------------
# Wrapper: one pallas_call, grid over the batch dimension.
# ---------------------------------------------------------------------------
def mha_forward(queries, keys, values, params, mask=None, *, n_heads):
    # `mask` intentionally unused: the reference's masked_fill result is
    # discarded, so the mask has no effect on the forward pass.
    del mask
    B, Lq, E = queries.shape
    Lk = keys.shape[1]
    assert E % n_heads == 0
    D = E // n_heads

    # Reference divides scores by Lk**(-1/2) == multiply by sqrt(Lk);
    # fold that scale into the Q projection weight (saves an [Lq,Lk] VPU mul).
    scale = float(Lk) ** 0.5
    wq_t = params["wq"].T * scale
    wk_t = params["wk"].T
    wv_t = params["wv"].T
    wfc_t = params["wfc"].T
    bfc = params["bfc"].reshape(1, E)

    kern = functools.partial(mha_kernel, n_heads=n_heads, head_dim=D)

    def fixed(shape):
        # Block == full array; constant index_map -> fetched once, kept in VMEM.
        return pl.BlockSpec(shape, lambda b: (0, 0))

    return pl.pallas_call(
        kern,
        out_shape=jax.ShapeDtypeStruct((B, Lq, E), jnp.float32),
        grid_spec=pltpu.PrefetchScalarGridSpec(
            num_scalar_prefetch=0,
            grid=(B,),
            in_specs=[
                pl.BlockSpec((pl.Squeezed(), Lq, E), lambda b: (b, 0, 0)),  # queries
                pl.BlockSpec((pl.Squeezed(), Lk, E), lambda b: (b, 0, 0)),  # keys
                pl.BlockSpec((pl.Squeezed(), Lk, E), lambda b: (b, 0, 0)),  # values
                fixed((D, D)),   # wq (pre-scaled)
                fixed((D, D)),   # wk
                fixed((D, D)),   # wv
                fixed((E, E)),   # wfc
                fixed((1, E)),   # bfc
            ],
            out_specs=pl.BlockSpec((pl.Squeezed(), Lq, E), lambda b: (b, 0, 0)),
        ),
        compiler_params=pltpu.CompilerParams(dimension_semantics=("parallel",)),
    )(queries, keys, values, wq_t, wk_t, wv_t, wfc_t, bfc)


# ---------------------------------------------------------------------------
# Deterministic parameter construction (PyTorch-shaped: weight is [out, in]).
# ---------------------------------------------------------------------------
def init_mha_params(key, embed_dim, n_heads):
    D = embed_dim // n_heads
    ks = jax.random.split(key, 5)
    s = 0.1
    return {
        "wq": jax.random.normal(ks[0], (D, D), jnp.float32) * s,            # Linear(D,D,bias=False)
        "wk": jax.random.normal(ks[1], (D, D), jnp.float32) * s,
        "wv": jax.random.normal(ks[2], (D, D), jnp.float32) * s,
        "wfc": jax.random.normal(ks[3], (embed_dim, embed_dim), jnp.float32) * s,  # Linear(E,E)
        "bfc": jax.random.normal(ks[4], (embed_dim,), jnp.float32) * s,
    }


# Pure-JAX reference mirroring the PyTorch forward (for a sanity check).
def mha_ref(queries, keys, values, params, n_heads):
    B, Lq, E = queries.shape
    Lk = keys.shape[1]
    D = E // n_heads
    q = queries.reshape(B, Lq, n_heads, D) @ params["wq"].T
    k = keys.reshape(B, Lk, n_heads, D) @ params["wk"].T
    v = values.reshape(B, Lk, n_heads, D) @ params["wv"].T
    s = jnp.einsum("bqhd,bkhd->bhqk", q, k)
    att = jax.nn.softmax(s / (Lk ** (-1 / 2)), axis=-1)
    out = jnp.einsum("bhqk,bkhd->bqhd", att, v).reshape(B, Lq, E)
    return out @ params["wfc"].T + params["bfc"]


if __name__ == "__main__":
    B, L, E, H = 2, 8, 32, 4

    root = jax.random.PRNGKey(0)
    kq, kk, kv, kp = jax.random.split(root, 4)
    queries = jax.random.normal(kq, (B, L, E), jnp.float32)
    keys = jax.random.normal(kk, (B, L, E), jnp.float32)
    values = jax.random.normal(kv, (B, L, E), jnp.float32)
    params = init_mha_params(kp, E, H)
    mask = jnp.ones((B, 1, 1, L), jnp.float32)  # accepted but (correctly) unused

    out = mha_forward(queries, keys, values, params, mask, n_heads=H)
    out = jax.block_until_ready(out)
    assert out.shape == (B, L, E) and out.dtype == jnp.float32

    ref = mha_ref(queries, keys, values, params, H)
    assert jnp.allclose(out, ref, rtol=2e-2, atol=2e-3), float(jnp.max(jnp.abs(out - ref)))
    print("KERNEL_OK")
</pallas_src>

<mosaic_0001>
module attributes {stable_mosaic.version = 11 : i64} {
  func.func @mha_kernel(%arg0: i32, %arg1: memref<1x8x32xf32, #tpu.memory_space<vmem>>, %arg2: memref<1x8x32xf32, #tpu.memory_space<vmem>>, %arg3: memref<1x8x32xf32, #tpu.memory_space<vmem>>, %arg4: memref<8x8xf32, #tpu.memory_space<vmem>>, %arg5: memref<8x8xf32, #tpu.memory_space<vmem>>, %arg6: memref<8x8xf32, #tpu.memory_space<vmem>>, %arg7: memref<32x32xf32, #tpu.memory_space<vmem>>, %arg8: memref<1x32xf32, #tpu.memory_space<vmem>>, %arg9: memref<1x8x32xf32, #tpu.memory_space<vmem>>) attributes {dimension_semantics = [#tpu.dimension_semantics<parallel>], iteration_bounds = array<i64: 2>, scalar_prefetch = 0 : i64, scratch_operands = 0 : i64, tpu.core_type = #tpu.core_type<tc>, window_params = [{transform_indices = @transform_0, window_bounds = array<i64: 1, 8, 32>}, {transform_indices = @transform_1, window_bounds = array<i64: 1, 8, 32>}, {transform_indices = @transform_2, window_bounds = array<i64: 1, 8, 32>}, {pipeline_mode = #tpu.pipeline_mode<synchronous>, transform_indices = @transform_3, window_bounds = array<i64: 8, 8>}, {pipeline_mode = #tpu.pipeline_mode<synchronous>, transform_indices = @transform_4, window_bounds = array<i64: 8, 8>}, {pipeline_mode = #tpu.pipeline_mode<synchronous>, transform_indices = @transform_5, window_bounds = array<i64: 8, 8>}, {pipeline_mode = #tpu.pipeline_mode<synchronous>, transform_indices = @transform_6, window_bounds = array<i64: 32, 32>}, {pipeline_mode = #tpu.pipeline_mode<synchronous>, transform_indices = @transform_7, window_bounds = array<i64: 1, 32>}, {transform_indices = @transform_8, window_bounds = array<i64: 1, 8, 32>}]} {
    %c0 = arith.constant 0 : index
    %c0_0 = arith.constant 0 : index
    %c0_1 = arith.constant 0 : index
    %0 = vector.load %arg1[%c0, %c0_0, %c0_1] : memref<1x8x32xf32, #tpu.memory_space<vmem>>, vector<1x8x32xf32>
    %1 = vector.shape_cast %0 : vector<1x8x32xf32> to vector<8x32xf32>
    %c0_2 = arith.constant 0 : index
    %c0_3 = arith.constant 0 : index
    %c0_4 = arith.constant 0 : index
    %2 = vector.load %arg2[%c0_2, %c0_3, %c0_4] : memref<1x8x32xf32, #tpu.memory_space<vmem>>, vector<1x8x32xf32>
    %3 = vector.shape_cast %2 : vector<1x8x32xf32> to vector<8x32xf32>
    %c0_5 = arith.constant 0 : index
    %c0_6 = arith.constant 0 : index
    %c0_7 = arith.constant 0 : index
    %4 = vector.load %arg3[%c0_5, %c0_6, %c0_7] : memref<1x8x32xf32, #tpu.memory_space<vmem>>, vector<1x8x32xf32>
    %5 = vector.shape_cast %4 : vector<1x8x32xf32> to vector<8x32xf32>
    %c0_8 = arith.constant 0 : index
    %c0_9 = arith.constant 0 : index
    %6 = vector.load %arg4[%c0_8, %c0_9] : memref<8x8xf32, #tpu.memory_space<vmem>>, vector<8x8xf32>
    %c0_10 = arith.constant 0 : index
    %c0_11 = arith.constant 0 : index
    %7 = vector.load %arg5[%c0_10, %c0_11] : memref<8x8xf32, #tpu.memory_space<vmem>>, vector<8x8xf32>
    %c0_12 = arith.constant 0 : index
    %c0_13 = arith.constant 0 : index
    %8 = vector.load %arg6[%c0_12, %c0_13] : memref<8x8xf32, #tpu.memory_space<vmem>>, vector<8x8xf32>
    %c0_14 = arith.constant 0 : index
    %c0_15 = arith.constant 0 : index
    %9 = vector.load %arg7[%c0_14, %c0_15] : memref<32x32xf32, #tpu.memory_space<vmem>>, vector<32x32xf32>
    %c0_16 = arith.constant 0 : index
    %c0_17 = arith.constant 0 : index
    %10 = vector.load %arg8[%c0_16, %c0_17] : memref<1x32xf32, #tpu.memory_space<vmem>>, vector<1x32xf32>
    %11 = vector.shape_cast %10 : vector<1x32xf32> to vector<1x32xf32>
    %12 = vector.broadcast %11 : vector<1x32xf32> to vector<8x32xf32>
    %13 = vector.extract_strided_slice %1 {offsets = [0, 0], sizes = [8, 8], strides = [1, 1]} : vector<8x32xf32> to vector<8x8xf32>
    %cst = arith.constant dense<0.000000e+00> : vector<8x8xf32>
    %14 = tpu.matmul %13, %6, %cst {dimension_numbers = #tpu.dot_dimension_numbers<[1], [0], [0], [1], [0, 0, 1, 1], [], []>} : vector<8x8xf32>, vector<8x8xf32>, vector<8x8xf32> -> vector<8x8xf32>
    %15 = vector.extract_strided_slice %3 {offsets = [0, 0], sizes = [8, 8], strides = [1, 1]} : vector<8x32xf32> to vector<8x8xf32>
    %cst_18 = arith.constant dense<0.000000e+00> : vector<8x8xf32>
    %16 = tpu.matmul %15, %7, %cst_18 {dimension_numbers = #tpu.dot_dimension_numbers<[1], [0], [0], [1], [0, 0, 1, 1], [], []>} : vector<8x8xf32>, vector<8x8xf32>, vector<8x8xf32> -> vector<8x8xf32>
    %17 = vector.extract_strided_slice %5 {offsets = [0, 0], sizes = [8, 8], strides = [1, 1]} : vector<8x32xf32> to vector<8x8xf32>
    %cst_19 = arith.constant dense<0.000000e+00> : vector<8x8xf32>
    %18 = tpu.matmul %17, %8, %cst_19 {dimension_numbers = #tpu.dot_dimension_numbers<[1], [0], [0], [1], [0, 0, 1, 1], [], []>} : vector<8x8xf32>, vector<8x8xf32>, vector<8x8xf32> -> vector<8x8xf32>
    %19 = tpu.transpose %16, [1, 0] : vector<8x8xf32> -> vector<8x8xf32>
    %cst_20 = arith.constant dense<0.000000e+00> : vector<8x8xf32>
    %20 = tpu.matmul %14, %19, %cst_20 {dimension_numbers = #tpu.dot_dimension_numbers<[1], [0], [0], [1], [0, 0, 1, 1], [], []>} : vector<8x8xf32>, vector<8x8xf32>, vector<8x8xf32> -> vector<8x8xf32>
    %cst_21 = arith.constant dense<0xFF800000> : vector<8xf32>
    %21 = vector.multi_reduction <maximumf>, %20, %cst_21 [1] : vector<8x8xf32> to vector<8xf32>
    %22 = vector.shape_cast %21 : vector<8xf32> to vector<8x1xf32>
    %23 = vector.broadcast %22 : vector<8x1xf32> to vector<8x8xf32>
    %24 = arith.subf %20, %23 : vector<8x8xf32>
    %25 = math.exp %24 : vector<8x8xf32>
    %cst_22 = arith.constant dense<0.000000e+00> : vector<8xf32>
    %26 = vector.multi_reduction <add>, %25, %cst_22 [1] : vector<8x8xf32> to vector<8xf32>
    %27 = vector.shape_cast %26 : vector<8xf32> to vector<8x1xf32>
    %28 = tpu.reciprocal %27 {approx = true} : vector<8x1xf32> -> vector<8x1xf32>
    %29 = vector.broadcast %28 : vector<8x1xf32> to vector<8x8xf32>
    %30 = arith.mulf %25, %29 : vector<8x8xf32>
    %cst_23 = arith.constant dense<0.000000e+00> : vector<8x8xf32>
    %31 = tpu.matmul %30, %18, %cst_23 {dimension_numbers = #tpu.dot_dimension_numbers<[1], [0], [0], [1], [0, 0, 1, 1], [], []>} : vector<8x8xf32>, vector<8x8xf32>, vector<8x8xf32> -> vector<8x8xf32>
    %32 = vector.extract_strided_slice %9 {offsets = [0, 0], sizes = [8, 32], strides = [1, 1]} : vector<32x32xf32> to vector<8x32xf32>
    %cst_24 = arith.constant dense<0.000000e+00> : vector<8x32xf32>
    %33 = tpu.matmul %31, %32, %cst_24 {dimension_numbers = #tpu.dot_dimension_numbers<[1], [0], [0], [1], [0, 0, 1, 1], [], []>} : vector<8x8xf32>, vector<8x32xf32>, vector<8x32xf32> -> vector<8x32xf32>
    %34 = arith.addf %12, %33 : vector<8x32xf32>
    %35 = vector.extract_strided_slice %1 {offsets = [0, 8], sizes = [8, 8], strides = [1, 1]} : vector<8x32xf32> to vector<8x8xf32>
    %cst_25 = arith.constant dense<0.000000e+00> : vector<8x8xf32>
    %36 = tpu.matmul %35, %6, %cst_25 {dimension_numbers = #tpu.dot_dimension_numbers<[1], [0], [0], [1], [0, 0, 1, 1], [], []>} : vector<8x8xf32>, vector<8x8xf32>, vector<8x8xf32> -> vector<8x8xf32>
    %37 = vector.extract_strided_slice %3 {offsets = [0, 8], sizes = [8, 8], strides = [1, 1]} : vector<8x32xf32> to vector<8x8xf32>
    %cst_26 = arith.constant dense<0.000000e+00> : vector<8x8xf32>
    %38 = tpu.matmul %37, %7, %cst_26 {dimension_numbers = #tpu.dot_dimension_numbers<[1], [0], [0], [1], [0, 0, 1, 1], [], []>} : vector<8x8xf32>, vector<8x8xf32>, vector<8x8xf32> -> vector<8x8xf32>
    %39 = vector.extract_strided_slice %5 {offsets = [0, 8], sizes = [8, 8], strides = [1, 1]} : vector<8x32xf32> to vector<8x8xf32>
    %cst_27 = arith.constant dense<0.000000e+00> : vector<8x8xf32>
    %40 = tpu.matmul %39, %8, %cst_27 {dimension_numbers = #tpu.dot_dimension_numbers<[1], [0], [0], [1], [0, 0, 1, 1], [], []>} : vector<8x8xf32>, vector<8x8xf32>, vector<8x8xf32> -> vector<8x8xf32>
    %41 = tpu.transpose %38, [1, 0] : vector<8x8xf32> -> vector<8x8xf32>
    %cst_28 = arith.constant dense<0.000000e+00> : vector<8x8xf32>
    %42 = tpu.matmul %36, %41, %cst_28 {dimension_numbers = #tpu.dot_dimension_numbers<[1], [0], [0], [1], [0, 0, 1, 1], [], []>} : vector<8x8xf32>, vector<8x8xf32>, vector<8x8xf32> -> vector<8x8xf32>
    %cst_29 = arith.constant dense<0xFF800000> : vector<8xf32>
    %43 = vector.multi_reduction <maximumf>, %42, %cst_29 [1] : vector<8x8xf32> to vector<8xf32>
    %44 = vector.shape_cast %43 : vector<8xf32> to vector<8x1xf32>
    %45 = vector.broadcast %44 : vector<8x1xf32> to vector<8x8xf32>
    %46 = arith.subf %42, %45 : vector<8x8xf32>
    %47 = math.exp %46 : vector<8x8xf32>
    %cst_30 = arith.constant dense<0.000000e+00> : vector<8xf32>
    %48 = vector.multi_reduction <add>, %47, %cst_30 [1] : vector<8x8xf32> to vector<8xf32>
    %49 = vector.shape_cast %48 : vector<8xf32> to vector<8x1xf32>
    %50 = tpu.reciprocal %49 {approx = true} : vector<8x1xf32> -> vector<8x1xf32>
    %51 = vector.broadcast %50 : vector<8x1xf32> to vector<8x8xf32>
    %52 = arith.mulf %47, %51 : vector<8x8xf32>
    %cst_31 = arith.constant dense<0.000000e+00> : vector<8x8xf32>
    %53 = tpu.matmul %52, %40, %cst_31 {dimension_numbers = #tpu.dot_dimension_numbers<[1], [0], [0], [1], [0, 0, 1, 1], [], []>} : vector<8x8xf32>, vector<8x8xf32>, vector<8x8xf32> -> vector<8x8xf32>
    %54 = vector.extract_strided_slice %9 {offsets = [8, 0], sizes = [8, 32], strides = [1, 1]} : vector<32x32xf32> to vector<8x32xf32>
    %cst_32 = arith.constant dense<0.000000e+00> : vector<8x32xf32>
    %55 = tpu.matmul %53, %54, %cst_32 {dimension_numbers = #tpu.dot_dimension_numbers<[1], [0], [0], [1], [0, 0, 1, 1], [], []>} : vector<8x8xf32>, vector<8x32xf32>, vector<8x32xf32> -> vector<8x32xf32>
    %56 = arith.addf %34, %55 : vector<8x32xf32>
    %57 = vector.extract_strided_slice %1 {offsets = [0, 16], sizes = [8, 8], strides = [1, 1]} : vector<8x32xf32> to vector<8x8xf32>
    %cst_33 = arith.constant dense<0.000000e+00> : vector<8x8xf32>
    %58 = tpu.matmul %57, %6, %cst_33 {dimension_numbers = #tpu.dot_dimension_numbers<[1], [0], [0], [1], [0, 0, 1, 1], [], []>} : vector<8x8xf32>, vector<8x8xf32>, vector<8x8xf32> -> vector<8x8xf32>
    %59 = vector.extract_strided_slice %3 {offsets = [0, 16], sizes = [8, 8], strides = [1, 1]} : vector<8x32xf32> to vector<8x8xf32>
    %cst_34 = arith.constant dense<0.000000e+00> : vector<8x8xf32>
    %60 = tpu.matmul %59, %7, %cst_34 {dimension_numbers = #tpu.dot_dimension_numbers<[1], [0], [0], [1], [0, 0, 1, 1], [], []>} : vector<8x8xf32>, vector<8x8xf32>, vector<8x8xf32> -> vector<8x8xf32>
    %61 = vector.extract_strided_slice %5 {offsets = [0, 16], sizes = [8, 8], strides = [1, 1]} : vector<8x32xf32> to vector<8x8xf32>
    %cst_35 = arith.constant dense<0.000000e+00> : vector<8x8xf32>
    %62 = tpu.matmul %61, %8, %cst_35 {dimension_numbers = #tpu.dot_dimension_numbers<[1], [0], [0], [1], [0, 0, 1, 1], [], []>} : vector<8x8xf32>, vector<8x8xf32>, vector<8x8xf32> -> vector<8x8xf32>
    %63 = tpu.transpose %60, [1, 0] : vector<8x8xf32> -> vector<8x8xf32>
    %cst_36 = arith.constant dense<0.000000e+00> : vector<8x8xf32>
    %64 = tpu.matmul %58, %63, %cst_36 {dimension_numbers = #tpu.dot_dimension_numbers<[1], [0], [0], [1], [0, 0, 1, 1], [], []>} : vector<8x8xf32>, vector<8x8xf32>, vector<8x8xf32> -> vector<8x8xf32>
    %cst_37 = arith.constant dense<0xFF800000> : vector<8xf32>
    %65 = vector.multi_reduction <maximumf>, %64, %cst_37 [1] : vector<8x8xf32> to vector<8xf32>
    %66 = vector.shape_cast %65 : vector<8xf32> to vector<8x1xf32>
    %67 = vector.broadcast %66 : vector<8x1xf32> to vector<8x8xf32>
    %68 = arith.subf %64, %67 : vector<8x8xf32>
    %69 = math.exp %68 : vector<8x8xf32>
    %cst_38 = arith.constant dense<0.000000e+00> : vector<8xf32>
    %70 = vector.multi_reduction <add>, %69, %cst_38 [1] : vector<8x8xf32> to vector<8xf32>
    %71 = vector.shape_cast %70 : vector<8xf32> to vector<8x1xf32>
    %72 = tpu.reciprocal %71 {approx = true} : vector<8x1xf32> -> vector<8x1xf32>
    %73 = vector.broadcast %72 : vector<8x1xf32> to vector<8x8xf32>
    %74 = arith.mulf %69, %73 : vector<8x8xf32>
    %cst_39 = arith.constant dense<0.000000e+00> : vector<8x8xf32>
    %75 = tpu.matmul %74, %62, %cst_39 {dimension_numbers = #tpu.dot_dimension_numbers<[1], [0], [0], [1], [0, 0, 1, 1], [], []>} : vector<8x8xf32>, vector<8x8xf32>, vector<8x8xf32> -> vector<8x8xf32>
    %76 = vector.extract_strided_slice %9 {offsets = [16, 0], sizes = [8, 32], strides = [1, 1]} : vector<32x32xf32> to vector<8x32xf32>
    %cst_40 = arith.constant dense<0.000000e+00> : vector<8x32xf32>
    %77 = tpu.matmul %75, %76, %cst_40 {dimension_numbers = #tpu.dot_dimension_numbers<[1], [0], [0], [1], [0, 0, 1, 1], [], []>} : vector<8x8xf32>, vector<8x32xf32>, vector<8x32xf32> -> vector<8x32xf32>
    %78 = arith.addf %56, %77 : vector<8x32xf32>
    %79 = vector.extract_strided_slice %1 {offsets = [0, 24], sizes = [8, 8], strides = [1, 1]} : vector<8x32xf32> to vector<8x8xf32>
    %cst_41 = arith.constant dense<0.000000e+00> : vector<8x8xf32>
    %80 = tpu.matmul %79, %6, %cst_41 {dimension_numbers = #tpu.dot_dimension_numbers<[1], [0], [0], [1], [0, 0, 1, 1], [], []>} : vector<8x8xf32>, vector<8x8xf32>, vector<8x8xf32> -> vector<8x8xf32>
    %81 = vector.extract_strided_slice %3 {offsets = [0, 24], sizes = [8, 8], strides = [1, 1]} : vector<8x32xf32> to vector<8x8xf32>
    %cst_42 = arith.constant dense<0.000000e+00> : vector<8x8xf32>
    %82 = tpu.matmul %81, %7, %cst_42 {dimension_numbers = #tpu.dot_dimension_numbers<[1], [0], [0], [1], [0, 0, 1, 1], [], []>} : vector<8x8xf32>, vector<8x8xf32>, vector<8x8xf32> -> vector<8x8xf32>
    %83 = vector.extract_strided_slice %5 {offsets = [0, 24], sizes = [8, 8], strides = [1, 1]} : vector<8x32xf32> to vector<8x8xf32>
    %cst_43 = arith.constant dense<0.000000e+00> : vector<8x8xf32>
    %84 = tpu.matmul %83, %8, %cst_43 {dimension_numbers = #tpu.dot_dimension_numbers<[1], [0], [0], [1], [0, 0, 1, 1], [], []>} : vector<8x8xf32>, vector<8x8xf32>, vector<8x8xf32> -> vector<8x8xf32>
    %85 = tpu.transpose %82, [1, 0] : vector<8x8xf32> -> vector<8x8xf32>
    %cst_44 = arith.constant dense<0.000000e+00> : vector<8x8xf32>
    %86 = tpu.matmul %80, %85, %cst_44 {dimension_numbers = #tpu.dot_dimension_numbers<[1], [0], [0], [1], [0, 0, 1, 1], [], []>} : vector<8x8xf32>, vector<8x8xf32>, vector<8x8xf32> -> vector<8x8xf32>
    %cst_45 = arith.constant dense<0xFF800000> : vector<8xf32>
    %87 = vector.multi_reduction <maximumf>, %86, %cst_45 [1] : vector<8x8xf32> to vector<8xf32>
    %88 = vector.shape_cast %87 : vector<8xf32> to vector<8x1xf32>
    %89 = vector.broadcast %88 : vector<8x1xf32> to vector<8x8xf32>
    %90 = arith.subf %86, %89 : vector<8x8xf32>
    %91 = math.exp %90 : vector<8x8xf32>
    %cst_46 = arith.constant dense<0.000000e+00> : vector<8xf32>
    %92 = vector.multi_reduction <add>, %91, %cst_46 [1] : vector<8x8xf32> to vector<8xf32>
    %93 = vector.shape_cast %92 : vector<8xf32> to vector<8x1xf32>
    %94 = tpu.reciprocal %93 {approx = true} : vector<8x1xf32> -> vector<8x1xf32>
    %95 = vector.broadcast %94 : vector<8x1xf32> to vector<8x8xf32>
    %96 = arith.mulf %91, %95 : vector<8x8xf32>
    %cst_47 = arith.constant dense<0.000000e+00> : vector<8x8xf32>
    %97 = tpu.matmul %96, %84, %cst_47 {dimension_numbers = #tpu.dot_dimension_numbers<[1], [0], [0], [1], [0, 0, 1, 1], [], []>} : vector<8x8xf32>, vector<8x8xf32>, vector<8x8xf32> -> vector<8x8xf32>
    %98 = vector.extract_strided_slice %9 {offsets = [24, 0], sizes = [8, 32], strides = [1, 1]} : vector<32x32xf32> to vector<8x32xf32>
    %cst_48 = arith.constant dense<0.000000e+00> : vector<8x32xf32>
    %99 = tpu.matmul %97, %98, %cst_48 {dimension_numbers = #tpu.dot_dimension_numbers<[1], [0], [0], [1], [0, 0, 1, 1], [], []>} : vector<8x8xf32>, vector<8x32xf32>, vector<8x32xf32> -> vector<8x32xf32>
    %100 = arith.addf %78, %99 : vector<8x32xf32>
    %c0_49 = arith.constant 0 : index
    %c0_50 = arith.constant 0 : index
    %c0_51 = arith.constant 0 : index
    %101 = vector.load %arg9[%c0_49, %c0_50, %c0_51] : memref<1x8x32xf32, #tpu.memory_space<vmem>>, vector<1x8x32xf32>
    %102 = vector.shape_cast %101 : vector<1x8x32xf32> to vector<8x32xf32>
    %103 = vector.shape_cast %100 : vector<8x32xf32> to vector<1x8x32xf32>
    tpu.vector_store %arg9[%c0_49, %c0_50, %c0_51], %103 {strides = array<i32>} : memref<1x8x32xf32, #tpu.memory_space<vmem>>, vector<1x8x32xf32>,
    return
  }
  func.func @transform_0(%arg0: i32) -> (i32, i32, i32) {
    %c0_i32 = arith.constant 0 : i32
    %c0_i32_0 = arith.constant 0 : i32
    %c0_i32_1 = arith.constant 0 : i32
    return %arg0, %c0_i32, %c0_i32_0 : i32, i32, i32
  }
  func.func @transform_1(%arg0: i32) -> (i32, i32, i32) {
    %c0_i32 = arith.constant 0 : i32
    %c0_i32_0 = arith.constant 0 : i32
    %c0_i32_1 = arith.constant 0 : i32
    return %arg0, %c0_i32, %c0_i32_0 : i32, i32, i32
  }
  func.func @transform_2(%arg0: i32) -> (i32, i32, i32) {
    %c0_i32 = arith.constant 0 : i32
    %c0_i32_0 = arith.constant 0 : i32
    %c0_i32_1 = arith.constant 0 : i32
    return %arg0, %c0_i32, %c0_i32_0 : i32, i32, i32
  }
  func.func @transform_3(%arg0: i32) -> (i32, i32) {
    %c0_i32 = arith.constant 0 : i32
    %c0_i32_0 = arith.constant 0 : i32
    %c0_i32_1 = arith.constant 0 : i32
    return %c0_i32, %c0_i32_0 : i32, i32
  }
  func.func @transform_4(%arg0: i32) -> (i32, i32) {
    %c0_i32 = arith.constant 0 : i32
    %c0_i32_0 = arith.constant 0 : i32
    %c0_i32_1 = arith.constant 0 : i32
    return %c0_i32, %c0_i32_0 : i32, i32
  }
  func.func @transform_5(%arg0: i32) -> (i32, i32) {
    %c0_i32 = arith.constant 0 : i32
    %c0_i32_0 = arith.constant 0 : i32
    %c0_i32_1 = arith.constant 0 : i32
    return %c0_i32, %c0_i32_0 : i32, i32
  }
  func.func @transform_6(%arg0: i32) -> (i32, i32) {
    %c0_i32 = arith.constant 0 : i32
    %c0_i32_0 = arith.constant 0 : i32
    %c0_i32_1 = arith.constant 0 : i32
    return %c0_i32, %c0_i32_0 : i32, i32
  }
  func.func @transform_7(%arg0: i32) -> (i32, i32) {
    %c0_i32 = arith.constant 0 : i32
    %c0_i32_0 = arith.constant 0 : i32
    %c0_i32_1 = arith.constant 0 : i32
    return %c0_i32, %c0_i32_0 : i32, i32
  }
  func.func @transform_8(%arg0: i32) -> (i32, i32, i32) {
    %c0_i32 = arith.constant 0 : i32
    %c0_i32_0 = arith.constant 0 : i32
    %c0_i32_1 = arith.constant 0 : i32
    return %arg0, %c0_i32, %c0_i32_0 : i32, i32, i32
  }
}

</mosaic_0001>

<llo_original>
// kernel: tpu_custom_call.1
$region0: #{tpu_custom_call.1}
  #allocation0 [shape = 'u32[]', space=smem, size = 0x4, offset = 0x4, fixed_abs, tag = 'smem constant byte address 0x4 - core index']
  #allocation1 [shape = 'u32[72,128]{1,0:T(1,128)}', space=vmem, size = 0x9000, scoped, tag = 'internal scratch']
  %s0 = inlined_call_operand.hbm [shape: f32[2,8,32], index: 0, kind: input, shape index: {}]
  %s1 = inlined_call_operand.hbm [shape: f32[2,8,32], index: 1, kind: input, shape index: {}]
  %s2 = inlined_call_operand.hbm [shape: f32[2,8,32], index: 2, kind: input, shape index: {}]
  %s3 = inlined_call_operand.hbm [shape: f32[8,8], index: 3, kind: input, shape index: {}]
  %s4 = inlined_call_operand.hbm [shape: f32[8,8], index: 4, kind: input, shape index: {}]
  %s5 = inlined_call_operand.hbm [shape: f32[8,8], index: 5, kind: input, shape index: {}]
  %s6 = inlined_call_operand.hbm [shape: f32[32,32], index: 6, kind: input, shape index: {}]
  %s7 = inlined_call_operand.vmem [shape: f32[1,32], index: 7, kind: input, shape index: {}]
  %s8 = inlined_call_operand.hbm [shape: f32[2,8,32], index: 8, kind: output, shape index: {}]
  %s9 = sld [smem:[#allocation0]]
  $region93: #{tpu_custom_call.1} parent=0
    _
  %s11 = ssub.s32 1, %s9
  %s12 = scalar_select 0, %s11, %s9
  $region1: #{tpu_custom_call.1} parent=0
    #allocation2 [shape = 'u8[8192]{0}', space=vmem, size = 0x2000, scoped, tag = 'input window, operand 0']
    #allocation3 [shape = 's32[2]{0}', space=sflag, size = 0x8, scoped, tag = 'scoped memory for tpu_custom_call.1']
    #allocation4 [shape = 's32[2]{0}', space=sflag, size = 0x8, scoped, tag = 'scoped memory for tpu_custom_call.1']
    #allocation5 [shape = 'u8[8192]{0}', space=vmem, size = 0x2000, scoped, tag = 'input window, operand 1']
    #allocation6 [shape = 's32[2]{0}', space=sflag, size = 0x8, scoped, tag = 'scoped memory for tpu_custom_call.1']
    #allocation7 [shape = 'u8[8192]{0}', space=vmem, size = 0x2000, scoped, tag = 'input window, operand 2']
    #allocation8 [shape = 'u8[4096]{0}', space=vmem, size = 0x1000, scoped, tag = 'input window, operand 3, single buffered']
    #allocation9 [shape = 's32[1]{0}', space=sflag, size = 0x4, scoped, tag = 'scoped memory for tpu_custom_call.1']
    #allocation10 [shape = 'u8[4096]{0}', space=vmem, size = 0x1000, scoped, tag = 'input window, operand 4, single buffered']
    #allocation11 [shape = 'u8[4096]{0}', space=vmem, size = 0x1000, scoped, tag = 'input window, operand 5, single buffered']
    #allocation12 [shape = 's32[1]{0}', space=sflag, size = 0x4, scoped, tag = 'scoped memory for tpu_custom_call.1']
    #allocation13 [shape = 'u8[16384]{0}', space=vmem, size = 0x4000, scoped, tag = 'input window, operand 6, single buffered']
    #allocation14 [shape = 'u8[8192]{0}', space=vmem, size = 0x2000, scoped, tag = 'output window, operand 0']
    %13 = vsyncpa [#allocation3], 0
    %s14 = scalar_lea.sflag [#allocation3], 1
    %15 = vsyncpa %s14, 0
    %16 = vsyncpa [#allocation6], 0
    %s17 = scalar_lea.sflag [#allocation6], 1
    %18 = vsyncpa %s17, 0
    %19 = vsyncpa [#allocation9], 0
    %20 = vsyncpa [#allocation12], 0
    %21 = vsyncpa [#allocation4], 0
    %s22 = scalar_lea.sflag [#allocation4], 1
    %23 = vsyncpa %s22, 0
    loop: start=0, step=1, limit=4
    $region2: #{tpu_custom_call.1} parent=1 // loop_pre_header
      _
    $region3: #{tpu_custom_call.1} parent=1 // loop_header
      %s25 = sphi 0, %s29
      %p26 = scmp.ge.s32.totalorder %s25, 4
      %s35 = sphi 0, %s37
      %s38 = sphi 0, %s35
      %s39 = sphi 0, %s38
      %s55 = sphi 0, %s39
      %s61 = sphi 0, %s63
      %s64 = sphi 0, %s61
      %s65 = sphi 0, %s64
      %s81 = sphi 0, %s65
      %s87 = sphi 0, %s89
      %s90 = sphi 0, %s87
      %s91 = sphi 0, %s90
      %s107 = sphi 0, %s91
      %s111 = sphi 0, %s111
      %s113 = sphi 0, %s111
      %s114 = sphi 0, %s113
      %s128 = sphi 0, %s114
      %s132 = sphi 0, %s132
      %s134 = sphi 0, %s132
      %s135 = sphi 0, %s134
      %s149 = sphi 0, %s135
      %s153 = sphi 0, %s153
      %s155 = sphi 0, %s153
      %s156 = sphi 0, %s155
      %s170 = sphi 0, %s156
      %s174 = sphi 0, %s174
      %s176 = sphi 0, %s174
      %s177 = sphi 0, %s176
      %s191 = sphi 0, %s177
      %s195 = sphi 0, %s195
      %s197 = sphi 0, %s195
      %s198 = sphi 0, %s197
      %s212 = sphi 0, %s198
      %s218 = sphi 0, %s220
      %s221 = sphi 0, %s218
      %s222 = sphi 0, %s221
      %s238 = sphi 0, %s222
    $region4: #{tpu_custom_call.1} parent=1 // loop_header_branch
      %28 = sbr.rel (%p26) target = $region8
    $region5: #{tpu_custom_call.1} parent=1 // loop_body
      %s30 = ssub.s32 %s25, 1
      %s31 = ssub.s32 %s25, 2
      %s32 = sadd.s32 %s25, 1
      %s33 = ssub.s32 %s25, %s32
      %p34 = scmp.eq.s32.totalorder %s33, 0
      %s36 = sadd.s32 %s35, 1
      %s37 = scalar_select %p34, %s35, %s36
      %p40 = pneg %p34
      %p41 = scmp.eq.s32.totalorder %s25, 1
      %p42 = por %p40, %p41
      %p43 = scmp.ne.s32.totalorder %s35, %s38
      %p44 = scmp.eq.s32.totalorder %s25, 0
      %p45 = por %p43, %p44
      %p46 = scmp.ne.s32.totalorder %s35, %s38
      %p47 = scmp.eq.s32.totalorder %s30, 1
      %p48 = por %p46, %p47
      %p49 = scmp.ne.s32.totalorder %s38, %s39
      %p50 = scmp.eq.s32.totalorder %s30, 0
      %p51 = por %p49, %p50
      %p52 = scmp.ne.s32.totalorder %s38, %s39
      %p53 = scmp.eq.s32.totalorder %s31, 1
      %p54 = por %p52, %p53
      %p56 = scmp.ne.s32.totalorder %s39, %s55
      %p57 = scmp.eq.s32.totalorder %s31, 0
      %p58 = por %p56, %p57
      %s59 = ssub.s32 %s25, %s32
      %p60 = scmp.eq.s32.totalorder %s59, 0
      %s62 = sadd.s32 %s61, 1
      %s63 = scalar_select %p60, %s61, %s62
      %p66 = pneg %p60
      %p67 = scmp.eq.s32.totalorder %s25, 1
      %p68 = por %p66, %p67
      %p69 = scmp.ne.s32.totalorder %s61, %s64
      %p70 = scmp.eq.s32.totalorder %s25, 0
      %p71 = por %p69, %p70
      %p72 = scmp.ne.s32.totalorder %s61, %s64
      %p73 = scmp.eq.s32.totalorder %s30, 1
      %p74 = por %p72, %p73
      %p75 = scmp.ne.s32.totalorder %s64, %s65
      %p76 = scmp.eq.s32.totalorder %s30, 0
      %p77 = por %p75, %p76
      %p78 = scmp.ne.s32.totalorder %s64, %s65
      %p79 = scmp.eq.s32.totalorder %s31, 1
      %p80 = por %p78, %p79
      %p82 = scmp.ne.s32.totalorder %s65, %s81
      %p83 = scmp.eq.s32.totalorder %s31, 0
      %p84 = por %p82, %p83
      %s85 = ssub.s32 %s25, %s32
      %p86 = scmp.eq.s32.totalorder %s85, 0
      %s88 = sadd.s32 %s87, 1
      %s89 = scalar_select %p86, %s87, %s88
      %p92 = pneg %p86
      %p93 = scmp.eq.s32.totalorder %s25, 1
      %p94 = por %p92, %p93
      %p95 = scmp.ne.s32.totalorder %s87, %s90
      %p96 = scmp.eq.s32.totalorder %s25, 0
      %p97 = por %p95, %p96
      %p98 = scmp.ne.s32.totalorder %s87, %s90
      %p99 = scmp.eq.s32.totalorder %s30, 1
      %p100 = por %p98, %p99
      %p101 = scmp.ne.s32.totalorder %s90, %s91
      %p102 = scmp.eq.s32.totalorder %s30, 0
      %p103 = por %p101, %p102
      %p104 = scmp.ne.s32.totalorder %s90, %s91
      %p105 = scmp.eq.s32.totalorder %s31, 1
      %p106 = por %p104, %p105
      %p108 = scmp.ne.s32.totalorder %s91, %s107
      %p109 = scmp.eq.s32.totalorder %s31, 0
      %p110 = por %p108, %p109
      %s112 = sadd.s32 %s111, 1
      %p115 = scmp.eq.s32.totalorder %s25, 1
      %p116 = scmp.ne.s32.totalorder %s111, %s113
      %p117 = scmp.eq.s32.totalorder %s25, 0
      %p118 = por %p116, %p117
      %p119 = scmp.ne.s32.totalorder %s111, %s113
      %p120 = scmp.eq.s32.totalorder %s30, 1
      %p121 = por %p119, %p120
      %p122 = scmp.ne.s32.totalorder %s113, %s114
      %p123 = scmp.eq.s32.totalorder %s30, 0
      %p124 = por %p122, %p123
      %p125 = scmp.ne.s32.totalorder %s113, %s114
      %p126 = scmp.eq.s32.totalorder %s31, 1
      %p127 = por %p125, %p126
      %p129 = scmp.ne.s32.totalorder %s114, %s128
      %p130 = scmp.eq.s32.totalorder %s31, 0
      %p131 = por %p129, %p130
      %s133 = sadd.s32 %s132, 1
      %p136 = scmp.eq.s32.totalorder %s25, 1
      %p137 = scmp.ne.s32.totalorder %s132, %s134
      %p138 = scmp.eq.s32.totalorder %s25, 0
      %p139 = por %p137, %p138
      %p140 = scmp.ne.s32.totalorder %s132, %s134
      %p141 = scmp.eq.s32.totalorder %s30, 1
      %p142 = por %p140, %p141
      %p143 = scmp.ne.s32.totalorder %s134, %s135
      %p144 = scmp.eq.s32.totalorder %s30, 0
      %p145 = por %p143, %p144
      %p146 = scmp.ne.s32.totalorder %s134, %s135
      %p147 = scmp.eq.s32.totalorder %s31, 1
      %p148 = por %p146, %p147
      %p150 = scmp.ne.s32.totalorder %s135, %s149
      %p151 = scmp.eq.s32.totalorder %s31, 0
      %p152 = por %p150, %p151
      %s154 = sadd.s32 %s153, 1
      %p157 = scmp.eq.s32.totalorder %s25, 1
      %p158 = scmp.ne.s32.totalorder %s153, %s155
      %p159 = scmp.eq.s32.totalorder %s25, 0
      %p160 = por %p158, %p159
      %p161 = scmp.ne.s32.totalorder %s153, %s155
      %p162 = scmp.eq.s32.totalorder %s30, 1
      %p163 = por %p161, %p162
      %p164 = scmp.ne.s32.totalorder %s155, %s156
      %p165 = scmp.eq.s32.totalorder %s30, 0
      %p166 = por %p164, %p165
      %p167 = scmp.ne.s32.totalorder %s155, %s156
      %p168 = scmp.eq.s32.totalorder %s31, 1
      %p169 = por %p167, %p168
      %p171 = scmp.ne.s32.totalorder %s156, %s170
      %p172 = scmp.eq.s32.totalorder %s31, 0
      %p173 = por %p171, %p172
      %s175 = sadd.s32 %s174, 1
      %p178 = scmp.eq.s32.totalorder %s25, 1
      %p179 = scmp.ne.s32.totalorder %s174, %s176
      %p180 = scmp.eq.s32.totalorder %s25, 0
      %p181 = por %p179, %p180
      %p182 = scmp.ne.s32.totalorder %s174, %s176
      %p183 = scmp.eq.s32.totalorder %s30, 1
      %p184 = por %p182, %p183
      %p185 = scmp.ne.s32.totalorder %s176, %s177
      %p186 = scmp.eq.s32.totalorder %s30, 0
      %p187 = por %p185, %p186
      %p188 = scmp.ne.s32.totalorder %s176, %s177
      %p189 = scmp.eq.s32.totalorder %s31, 1
      %p190 = por %p188, %p189
      %p192 = scmp.ne.s32.totalorder %s177, %s191
      %p193 = scmp.eq.s32.totalorder %s31, 0
      %p194 = por %p192, %p193
      %s196 = sadd.s32 %s195, 1
      %p199 = scmp.eq.s32.totalorder %s25, 1
      %p200 = scmp.ne.s32.totalorder %s195, %s197
      %p201 = scmp.eq.s32.totalorder %s25, 0
      %p202 = por %p200, %p201
      %p203 = scmp.ne.s32.totalorder %s195, %s197
      %p204 = scmp.eq.s32.totalorder %s30, 1
      %p205 = por %p203, %p204
      %p206 = scmp.ne.s32.totalorder %s197, %s198
      %p207 = scmp.eq.s32.totalorder %s30, 0
      %p208 = por %p206, %p207
      %p209 = scmp.ne.s32.totalorder %s197, %s198
      %p210 = scmp.eq.s32.totalorder %s31, 1
      %p211 = por %p209, %p210
      %p213 = scmp.ne.s32.totalorder %s198, %s212
      %p214 = scmp.eq.s32.totalorder %s31, 0
      %p215 = por %p213, %p214
      %s216 = ssub.s32 %s25, %s32
      %p217 = scmp.eq.s32.totalorder %s216, 0
      %s219 = sadd.s32 %s218, 1
      %s220 = scalar_select %p217, %s218, %s219
      %p223 = pneg %p217
      %p224 = scmp.eq.s32.totalorder %s25, 1
      %p225 = por %p223, %p224
      %p226 = scmp.ne.s32.totalorder %s218, %s221
      %p227 = scmp.eq.s32.totalorder %s25, 0
      %p228 = por %p226, %p227
      %p229 = scmp.ne.s32.totalorder %s218, %s221
      %p230 = scmp.eq.s32.totalorder %s30, 1
      %p231 = por %p229, %p230
      %p232 = scmp.ne.s32.totalorder %s221, %s222
      %p233 = scmp.eq.s32.totalorder %s30, 0
      %p234 = por %p232, %p233
      %p235 = scmp.ne.s32.totalorder %s221, %s222
      %p236 = scmp.eq.s32.totalorder %s31, 1
      %p237 = por %p235, %p236
      %p239 = scmp.ne.s32.totalorder %s222, %s238
      %p240 = scmp.eq.s32.totalorder %s31, 0
      %p241 = por %p239, %p240
      %p242 = scmp.le.s32.totalorder 1, %s25
      %p243 = scmp.lt.s32.totalorder %s25, 3
      %p244 = pnand %p242, %p243
      %p245 = pneg %p244
      // Predicated region
      $region9: #{tpu_custom_call.1} parent=5 // pred_check
        _
      $region10: #{tpu_custom_call.1} parent=5 // pred_check_branch
        %247 = sbr.rel (%p244) target = $region12
      $region11: #{tpu_custom_call.1} parent=5 // pred_region
        %s248 = ssub.s32 %s25, 1
        // Predicated region
        $region13: #{tpu_custom_call.1} parent=11 // pred_check
          %p249 = pneg %p124
        $region14: #{tpu_custom_call.1} parent=11 // pred_check_branch
          %251 = sbr.rel (%p249) target = $region16
        $region15: #{tpu_custom_call.1} parent=11 // pred_region
          %253 = vsyncadd [#allocation9], 0
          %s255 = sshll.u32 %s3, 4
          %s256 = int_to_ptr.hbm [resolvable:$true] %s255
          %s257 = sshll.u32 [#allocation8], 4
          %s258 = int_to_ptr.vmem [resolvable:$true] %s257
          %260 = dma.hbm_to_vmem [thread:$0]  %s256, 128, %s258, [#allocation9]
        $region16: #{tpu_custom_call.1} parent=11 // pred_fallthru
          _
        // Predicated region
        $region17: #{tpu_custom_call.1} parent=11 // pred_check
          %p261 = pneg %p145
        $region18: #{tpu_custom_call.1} parent=11 // pred_check_branch
          %263 = sbr.rel (%p261) target = $region20
        $region19: #{tpu_custom_call.1} parent=11 // pred_region
          %265 = vsyncadd [#allocation9], 0
          %s267 = sshll.u32 %s4, 4
          %s268 = int_to_ptr.hbm [resolvable:$true] %s267
          %s269 = sshll.u32 [#allocation10], 4
          %s270 = int_to_ptr.vmem [resolvable:$true] %s269
          %272 = dma.hbm_to_vmem [thread:$0]  %s268, 128, %s270, [#allocation9]
        $region20: #{tpu_custom_call.1} parent=11 // pred_fallthru
          _
        // Predicated region
        $region21: #{tpu_custom_call.1} parent=11 // pred_check
          %p273 = pneg %p166
        $region22: #{tpu_custom_call.1} parent=11 // pred_check_branch
          %275 = sbr.rel (%p273) target = $region24
        $region23: #{tpu_custom_call.1} parent=11 // pred_region
          %277 = vsyncadd [#allocation12], 0
          %s279 = sshll.u32 %s5, 4
          %s280 = int_to_ptr.hbm [resolvable:$true] %s279
          %s281 = sshll.u32 [#allocation11], 4
          %s282 = int_to_ptr.vmem [resolvable:$true] %s281
          %284 = dma.hbm_to_vmem [thread:$0]  %s280, 128, %s282, [#allocation12]
        $region24: #{tpu_custom_call.1} parent=11 // pred_fallthru
          _
        // Predicated region
        $region25: #{tpu_custom_call.1} parent=11 // pred_check
          %p285 = pneg %p187
        $region26: #{tpu_custom_call.1} parent=11 // pred_check_branch
          %287 = sbr.rel (%p285) target = $region28
        $region27: #{tpu_custom_call.1} parent=11 // pred_region
          %289 = vsyncadd [#allocation12], 0
          %s290 = sshll.u32 %s6, 4
          %s291 = int_to_ptr.hbm [resolvable:$true] %s290
          %s292 = sshll.u32 [#allocation13], 4
          %s293 = int_to_ptr.vmem [resolvable:$true] %s292
          %298 = dma.hbm_to_vmem [thread:$0]  %s291, 512, %s293, [#allocation12], 128, 128, 8
        $region28: #{tpu_custom_call.1} parent=11 // pred_fallthru
          _
        // Predicated region
        $region29: #{tpu_custom_call.1} parent=11 // pred_check
          %p299 = pneg %p208
        $region30: #{tpu_custom_call.1} parent=11 // pred_check_branch
          %301 = sbr.rel (%p299) target = $region32
        $region31: #{tpu_custom_call.1} parent=11 // pred_region
          _
        $region32: #{tpu_custom_call.1} parent=11 // pred_fallthru
          _
      $region12: #{tpu_custom_call.1} parent=5 // pred_fallthru
        _
      %p302 = scmp.lt.s32.totalorder %s25, 2
      // Predicated region
      $region33: #{tpu_custom_call.1} parent=5 // pred_check
        %p303 = pneg %p302
      $region34: #{tpu_custom_call.1} parent=5 // pred_check_branch
        %305 = sbr.rel (%p303) target = $region36
      $region35: #{tpu_custom_call.1} parent=5 // pred_region
        // Predicated region
        $region37: #{tpu_custom_call.1} parent=35 // pred_check
          %p306 = pneg %p45
        $region38: #{tpu_custom_call.1} parent=35 // pred_check_branch
          %308 = sbr.rel (%p306) target = $region40
        $region39: #{tpu_custom_call.1} parent=35 // pred_region
          %s309 = sand.u32 %s35, 1
          %s310 = scalar_lea.sflag [#allocation3], %s309
          %s311 = sand.u32 %s35, 1
          %s312 = smul.addr %s311, 8
          %s313 = scalar_lea.vmem [#allocation2], %s312
          %315 = vsyncadd %s310, 0
          %s316 = smul.addr %s25, 8
          %s317 = scalar_lea.hbm %s0, %s316
          %s319 = sshll.u32 %s317, 4
          %s320 = int_to_ptr.hbm [resolvable:$true] %s319
          %s321 = sshll.u32 %s313, 4
          %s322 = int_to_ptr.vmem [resolvable:$true] %s321
          %324 = dma.hbm_to_vmem [thread:$0]  %s320, 128, %s322, %s310
        $region40: #{tpu_custom_call.1} parent=35 // pred_fallthru
          _
        // Predicated region
        $region41: #{tpu_custom_call.1} parent=35 // pred_check
          %p325 = pneg %p71
        $region42: #{tpu_custom_call.1} parent=35 // pred_check_branch
          %327 = sbr.rel (%p325) target = $region44
        $region43: #{tpu_custom_call.1} parent=35 // pred_region
          %s328 = sand.u32 %s25, 1
          %s329 = scalar_lea.sflag [#allocation6], %s328
          %s330 = sand.u32 %s61, 1
          %s331 = smul.addr %s330, 8
          %s332 = scalar_lea.vmem [#allocation5], %s331
          %334 = vsyncadd %s329, 0
          %s335 = smul.addr %s25, 8
          %s336 = scalar_lea.hbm %s1, %s335
          %s338 = sshll.u32 %s336, 4
          %s339 = int_to_ptr.hbm [resolvable:$true] %s338
          %s340 = sshll.u32 %s332, 4
          %s341 = int_to_ptr.vmem [resolvable:$true] %s340
          %343 = dma.hbm_to_vmem [thread:$0]  %s339, 128, %s341, %s329
        $region44: #{tpu_custom_call.1} parent=35 // pred_fallthru
          _
        // Predicated region
        $region45: #{tpu_custom_call.1} parent=35 // pred_check
          %p344 = pneg %p97
        $region46: #{tpu_custom_call.1} parent=35 // pred_check_branch
          %346 = sbr.rel (%p344) target = $region48
        $region47: #{tpu_custom_call.1} parent=35 // pred_region
          %s347 = sand.u32 %s25, 1
          %s348 = scalar_lea.sflag [#allocation6], %s347
          %s349 = sand.u32 %s87, 1
          %s350 = smul.addr %s349, 8
          %s351 = scalar_lea.vmem [#allocation7], %s350
          %353 = vsyncadd %s348, 0
          %s354 = smul.addr %s25, 8
          %s355 = scalar_lea.hbm %s2, %s354
          %s357 = sshll.u32 %s355, 4
          %s358 = int_to_ptr.hbm [resolvable:$true] %s357
          %s359 = sshll.u32 %s351, 4
          %s360 = int_to_ptr.vmem [resolvable:$true] %s359
          %362 = dma.hbm_to_vmem [thread:$0]  %s358, 128, %s360, %s348
        $region48: #{tpu_custom_call.1} parent=35 // pred_fallthru
          _
      $region36: #{tpu_custom_call.1} parent=5 // pred_fallthru
        _
      %p363 = scmp.le.s32.totalorder 1, %s25
      %p364 = scmp.lt.s32.totalorder %s25, 3
      %p365 = pnand %p363, %p364
      %p366 = pneg %p365
      // Predicated region
      $region49: #{tpu_custom_call.1} parent=5 // pred_check
        _
      $region50: #{tpu_custom_call.1} parent=5 // pred_check_branch
        %368 = sbr.rel (%p365) target = $region52
      $region51: #{tpu_custom_call.1} parent=5 // pred_region
        %s369 = ssub.s32 %s25, 1
        %s370 = sand.u32 %s38, 1
        %s371 = scalar_lea.sflag [#allocation3], %s370
        %s372 = sand.u32 %s38, 1
        %s373 = smul.addr %s372, 8
        %s374 = scalar_lea.vmem [#allocation2], %s373
        // Predicated region
        $region53: #{tpu_custom_call.1} parent=51 // pred_check
          %p375 = pneg %p51
        $region54: #{tpu_custom_call.1} parent=51 // pred_check_branch
          %377 = sbr.rel (%p375) target = $region56
        $region55: #{tpu_custom_call.1} parent=51 // pred_region
          %379 = dma.done %s371, 128
        $region56: #{tpu_custom_call.1} parent=51 // pred_fallthru
          _
        %s380 = sand.u32 %s30, 1
        %s381 = scalar_lea.sflag [#allocation6], %s380
        %s382 = sand.u32 %s64, 1
        %s383 = smul.addr %s382, 8
        %s384 = scalar_lea.vmem [#allocation5], %s383
        // Predicated region
        $region57: #{tpu_custom_call.1} parent=51 // pred_check
          %p385 = pneg %p77
        $region58: #{tpu_custom_call.1} parent=51 // pred_check_branch
          %387 = sbr.rel (%p385) target = $region60
        $region59: #{tpu_custom_call.1} parent=51 // pred_region
          %389 = dma.done %s381, 128
        $region60: #{tpu_custom_call.1} parent=51 // pred_fallthru
          _
        %s390 = sand.u32 %s30, 1
        %s391 = scalar_lea.sflag [#allocation6], %s390
        %s392 = sand.u32 %s90, 1
        %s393 = smul.addr %s392, 8
        %s394 = scalar_lea.vmem [#allocation7], %s393
        // Predicated region
        $region61: #{tpu_custom_call.1} parent=51 // pred_check
          %p395 = pneg %p103
        $region62: #{tpu_custom_call.1} parent=51 // pred_check_branch
          %397 = sbr.rel (%p395) target = $region64
        $region63: #{tpu_custom_call.1} parent=51 // pred_region
          %399 = dma.done %s391, 128
        $region64: #{tpu_custom_call.1} parent=51 // pred_fallthru
          _
        // Predicated region
        $region65: #{tpu_custom_call.1} parent=51 // pred_check
          %p400 = pneg %p124
        $region66: #{tpu_custom_call.1} parent=51 // pred_check_branch
          %402 = sbr.rel (%p400) target = $region68
        $region67: #{tpu_custom_call.1} parent=51 // pred_region
          %404 = dma.done [#allocation9], 128
        $region68: #{tpu_custom_call.1} parent=51 // pred_fallthru
          _
        // Predicated region
        $region69: #{tpu_custom_call.1} parent=51 // pred_check
          %p405 = pneg %p145
        $region70: #{tpu_custom_call.1} parent=51 // pred_check_branch
          %407 = sbr.rel (%p405) target = $region72
        $region71: #{tpu_custom_call.1} parent=51 // pred_region
          %409 = dma.done [#allocation9], 128
        $region72: #{tpu_custom_call.1} parent=51 // pred_fallthru
          _
        // Predicated region
        $region73: #{tpu_custom_call.1} parent=51 // pred_check
          %p410 = pneg %p166
        $region74: #{tpu_custom_call.1} parent=51 // pred_check_branch
          %412 = sbr.rel (%p410) target = $region76
        $region75: #{tpu_custom_call.1} parent=51 // pred_region
          %414 = dma.done [#allocation12], 128
        $region76: #{tpu_custom_call.1} parent=51 // pred_fallthru
          _
        // Predicated region
        $region77: #{tpu_custom_call.1} parent=51 // pred_check
          %p415 = pneg %p187
        $region78: #{tpu_custom_call.1} parent=51 // pred_check_branch
          %417 = sbr.rel (%p415) target = $region80
        $region79: #{tpu_custom_call.1} parent=51 // pred_region
          %419 = dma.done [#allocation12], 512
        $region80: #{tpu_custom_call.1} parent=51 // pred_fallthru
          _
        %s420 = sand.u32 %s38, 1
        %s421 = scalar_lea.sflag [#allocation3], %s420
        %s422 = sand.u32 %s38, 1
        %s423 = smul.addr %s422, 8
        %s424 = scalar_lea.vmem [#allocation2], %s423
        %p425 = pneg %p51
        %p426 = pneg %p48
        %s427 = sand.u32 %s30, 1
        %s428 = scalar_lea.sflag [#allocation6], %s427
        %s429 = sand.u32 %s64, 1
        %s430 = smul.addr %s429, 8
        %s431 = scalar_lea.vmem [#allocation5], %s430
        %p432 = pneg %p77
        %p433 = pneg %p74
        %s434 = sand.u32 %s30, 1
        %s435 = scalar_lea.sflag [#allocation6], %s434
        %s436 = sand.u32 %s90, 1
        %s437 = smul.addr %s436, 8
        %s438 = scalar_lea.vmem [#allocation7], %s437
        %p439 = pneg %p103
        %p440 = pneg %p100
        %p441 = pneg %p124
        %p442 = pneg %p121
        %p443 = pneg %p145
        %p444 = pneg %p142
        %p445 = pneg %p166
        %p446 = pneg %p163
        %p447 = pneg %p187
        %p448 = pneg %p184
        %p449 = pneg %p208
        %p450 = pneg %p205
        %p451 = pneg %p234
        %p452 = pneg %p231
        %s453 = sand.u32 %s221, 1
        %s454 = scalar_lea.sflag [#allocation4], %s453
        %s455 = sand.u32 %s221, 1
        %s456 = smul.addr %s455, 8
        %s457 = scalar_lea.vmem [#allocation14], %s456
        %v458 = vld [vmem:[%s374] sm:$0xff]
        %v459 = vld [vmem:[%s384] sm:$0xff]
        %v460 = vld [vmem:[%s394] sm:$0xff]
        %v461 = vld [vmem:[#allocation8] sm:$0xff]
        %v462 = vld [vmem:[#allocation10] sm:$0xff]
        %v463 = vld [vmem:[#allocation11] sm:$0xff]
        %v464 = vld [vmem:[#allocation13] sm:$0xff]
        %v465 = vld [vmem:[#allocation13 + $0x8] sm:$0xff]
        %v466 = vld [vmem:[#allocation13 + $0x10] sm:$0xff]
        %v467 = vld [vmem:[#allocation13 + $0x18] sm:$0xff]
        %v468 = vld [vmem:[%s7] sm:$0x1]
        %v470 = vperm.slane %v468, 0
        %vm472 = vcmask 64512
        %v474 = vsel %vm472, %v458, 0
        %476 = vmatpush.msra.mxu0 0.0
        %477 = vmatpush.msra.mxu0 0.0
        %478 = vmatpush.msra.mxu0 0.0
        %479 = vmatpush.msra.mxu0 0.0
        %480 = vmatpush.msra.mxu0 0.0
        %481 = vmatpush.msra.mxu0 0.0
        %482 = vmatpush.msra.mxu0 0.0
        %483 = vmatpush.msra.mxu0 0.0
        %484 = vmatpush.msra.mxu0 0.0
        %485 = vmatpush.msra.mxu0 0.0
        %486 = vmatpush.msra.mxu0 0.0
        %487 = vmatpush.msra.mxu0 0.0
        %488 = vmatpush.msra.mxu0 0.0
        %489 = vmatpush.msra.mxu0 0.0
        %490 = vmatpush.msra.mxu0 0.0
        %491 = vmatpush.msra.mxu0 %v461
        %492 = vmatmul.f32.gmra.mxu0 %v474
        %v493 = vpop.f32.mrf.mxu0
        %v494 = vadd.f32 0.0, %v493
        %495 = vdwg.mxu0
        %v497 = vsel %vm472, %v459, 0
        %499 = vmatpush.msra.mxu0 0.0
        %500 = vmatpush.msra.mxu0 0.0
        %501 = vmatpush.msra.mxu0 0.0
        %502 = vmatpush.msra.mxu0 0.0
        %503 = vmatpush.msra.mxu0 0.0
        %504 = vmatpush.msra.mxu0 0.0
        %505 = vmatpush.msra.mxu0 0.0
        %506 = vmatpush.msra.mxu0 0.0
        %507 = vmatpush.msra.mxu0 0.0
        %508 = vmatpush.msra.mxu0 0.0
        %509 = vmatpush.msra.mxu0 0.0
        %510 = vmatpush.msra.mxu0 0.0
        %511 = vmatpush.msra.mxu0 0.0
        %512 = vmatpush.msra.mxu0 0.0
        %513 = vmatpush.msra.mxu0 0.0
        %514 = vmatpush.msra.mxu0 %v462
        %515 = vmatmul.f32.gmra.mxu0 %v497
        %v516 = vpop.f32.mrf.mxu0
        %v517 = vadd.f32 0.0, %v516
        %518 = vdwg.mxu0
        %v520 = vsel %vm472, %v460, 0
        %522 = vmatpush.msra.mxu0 0.0
        %523 = vmatpush.msra.mxu0 0.0
        %524 = vmatpush.msra.mxu0 0.0
        %525 = vmatpush.msra.mxu0 0.0
        %526 = vmatpush.msra.mxu0 0.0
        %527 = vmatpush.msra.mxu0 0.0
        %528 = vmatpush.msra.mxu0 0.0
        %529 = vmatpush.msra.mxu0 0.0
        %530 = vmatpush.msra.mxu0 0.0
        %531 = vmatpush.msra.mxu0 0.0
        %532 = vmatpush.msra.mxu0 0.0
        %533 = vmatpush.msra.mxu0 0.0
        %534 = vmatpush.msra.mxu0 0.0
        %535 = vmatpush.msra.mxu0 0.0
        %536 = vmatpush.msra.mxu0 0.0
        %537 = vmatpush.msra.mxu0 %v463
        %538 = vmatmul.f32.gmra.mxu0 %v520
        %v539 = vpop.f32.mrf.mxu0
        %v540 = vadd.f32 0.0, %v539
        %541 = vdwg.mxu0
        %v543 = vsel %vm472, %v494, 0
        %v546 = vsel %vm472, %v517, 0
        %548 = vmatpush.xpose.msra.mxu0 0.0
        %549 = vmatpush.xpose.msra.mxu0 0.0
        %550 = vmatpush.xpose.msra.mxu0 0.0
        %551 = vmatpush.xpose.msra.mxu0 0.0
        %552 = vmatpush.xpose.msra.mxu0 0.0
        %553 = vmatpush.xpose.msra.mxu0 0.0
        %554 = vmatpush.xpose.msra.mxu0 0.0
        %555 = vmatpush.xpose.msra.mxu0 0.0
        %556 = vmatpush.xpose.msra.mxu0 0.0
        %557 = vmatpush.xpose.msra.mxu0 0.0
        %558 = vmatpush.xpose.msra.mxu0 0.0
        %559 = vmatpush.xpose.msra.mxu0 0.0
        %560 = vmatpush.xpose.msra.mxu0 0.0
        %561 = vmatpush.xpose.msra.mxu0 0.0
        %562 = vmatpush.xpose.msra.mxu0 0.0
        %563 = vmatpush.xpose.msra.mxu0 %v546
        %564 = vmatmul.f32.gmra.mxu0 %v543
        %v565 = vpop.f32.mrf.mxu0
        %v566 = vadd.f32 0.0, %v565
        %567 = vdwg.mxu0
        %v568 = vsel %vm472, %v566, -inf
        %569 = vmax.xlane.f32.xlu0 %v568
        %v570 = vpop.xlane.xlu0 %569
        %v571 = vsub.f32 %v566, %v570
        %v572 = vmul.f32 %v571, 1.442695
        %v573 = vpow.pop %v572
        %v574 = vsel %vm472, %v573, 0.0
        %575 = vadd.xlane.f32.xlu0 %v574
        %v576 = vpop.xlane.xlu0 %575
        %v577 = vrcp.pop %v576
        %v578 = vmul.f32 %v573, %v577
        %v580 = vsel %vm472, %v578, 0
        %582 = vmatpush.msra.mxu0 0.0
        %583 = vmatpush.msra.mxu0 0.0
        %584 = vmatpush.msra.mxu0 0.0
        %585 = vmatpush.msra.mxu0 0.0
        %586 = vmatpush.msra.mxu0 0.0
        %587 = vmatpush.msra.mxu0 0.0
        %588 = vmatpush.msra.mxu0 0.0
        %589 = vmatpush.msra.mxu0 0.0
        %590 = vmatpush.msra.mxu0 0.0
        %591 = vmatpush.msra.mxu0 0.0
        %592 = vmatpush.msra.mxu0 0.0
        %593 = vmatpush.msra.mxu0 0.0
        %594 = vmatpush.msra.mxu0 0.0
        %595 = vmatpush.msra.mxu0 0.0
        %596 = vmatpush.msra.mxu0 0.0
        %597 = vmatpush.msra.mxu0 %v540
        %598 = vmatmul.f32.gmra.mxu0 %v580
        %v599 = vpop.f32.mrf.mxu0
        %v600 = vadd.f32 0.0, %v599
        %601 = vdwg.mxu0
        %v603 = vsel %vm472, %v600, 0
        %605 = vmatpush.msra.mxu0 0.0
        %606 = vmatpush.msra.mxu0 0.0
        %607 = vmatpush.msra.mxu0 0.0
        %608 = vmatpush.msra.mxu0 0.0
        %609 = vmatpush.msra.mxu0 0.0
        %610 = vmatpush.msra.mxu0 0.0
        %611 = vmatpush.msra.mxu0 0.0
        %612 = vmatpush.msra.mxu0 0.0
        %613 = vmatpush.msra.mxu0 0.0
        %614 = vmatpush.msra.mxu0 0.0
        %615 = vmatpush.msra.mxu0 0.0
        %616 = vmatpush.msra.mxu0 0.0
        %617 = vmatpush.msra.mxu0 0.0
        %618 = vmatpush.msra.mxu0 0.0
        %619 = vmatpush.msra.mxu0 0.0
        %620 = vmatpush.msra.mxu0 %v464
        %621 = vmatmul.f32.gmra.mxu0 %v603
        %v622 = vpop.f32.mrf.mxu0
        %v623 = vadd.f32 0.0, %v622
        %624 = vdwg.mxu0
        %v625 = vadd.f32 %v470, %v623
        %626 = vrot.lane.b32.xlu0 %v458, 120
        %v627 = vpop.permute.xlu0 %626
        %v628 = vsel %vm472, %v627, 0
        %630 = vmatpush.msra.mxu0 0.0
        %631 = vmatpush.msra.mxu0 0.0
        %632 = vmatpush.msra.mxu0 0.0
        %633 = vmatpush.msra.mxu0 0.0
        %634 = vmatpush.msra.mxu0 0.0
        %635 = vmatpush.msra.mxu0 0.0
        %636 = vmatpush.msra.mxu0 0.0
        %637 = vmatpush.msra.mxu0 0.0
        %638 = vmatpush.msra.mxu0 0.0
        %639 = vmatpush.msra.mxu0 0.0
        %640 = vmatpush.msra.mxu0 0.0
        %641 = vmatpush.msra.mxu0 0.0
        %642 = vmatpush.msra.mxu0 0.0
        %643 = vmatpush.msra.mxu0 0.0
        %644 = vmatpush.msra.mxu0 0.0
        %645 = vmatpush.msra.mxu0 %v461
        %646 = vmatmul.f32.gmra.mxu0 %v628
        %v647 = vpop.f32.mrf.mxu0
        %v648 = vadd.f32 0.0, %v647
        %649 = vdwg.mxu0
        %650 = vrot.lane.b32.xlu0 %v459, 120
        %v651 = vpop.permute.xlu0 %650
        %v652 = vsel %vm472, %v651, 0
        %654 = vmatpush.msra.mxu0 0.0
        %655 = vmatpush.msra.mxu0 0.0
        %656 = vmatpush.msra.mxu0 0.0
        %657 = vmatpush.msra.mxu0 0.0
        %658 = vmatpush.msra.mxu0 0.0
        %659 = vmatpush.msra.mxu0 0.0
        %660 = vmatpush.msra.mxu0 0.0
        %661 = vmatpush.msra.mxu0 0.0
        %662 = vmatpush.msra.mxu0 0.0
        %663 = vmatpush.msra.mxu0 0.0
        %664 = vmatpush.msra.mxu0 0.0
        %665 = vmatpush.msra.mxu0 0.0
        %666 = vmatpush.msra.mxu0 0.0
        %667 = vmatpush.msra.mxu0 0.0
        %668 = vmatpush.msra.mxu0 0.0
        %669 = vmatpush.msra.mxu0 %v462
        %670 = vmatmul.f32.gmra.mxu0 %v652
        %v671 = vpop.f32.mrf.mxu0
        %v672 = vadd.f32 0.0, %v671
        %673 = vdwg.mxu0
        %674 = vrot.lane.b32.xlu0 %v460, 120
        %v675 = vpop.permute.xlu0 %674
        %v676 = vsel %vm472, %v675, 0
        %678 = vmatpush.msra.mxu0 0.0
        %679 = vmatpush.msra.mxu0 0.0
        %680 = vmatpush.msra.mxu0 0.0
        %681 = vmatpush.msra.mxu0 0.0
        %682 = vmatpush.msra.mxu0 0.0
        %683 = vmatpush.msra.mxu0 0.0
        %684 = vmatpush.msra.mxu0 0.0
        %685 = vmatpush.msra.mxu0 0.0
        %686 = vmatpush.msra.mxu0 0.0
        %687 = vmatpush.msra.mxu0 0.0
        %688 = vmatpush.msra.mxu0 0.0
        %689 = vmatpush.msra.mxu0 0.0
        %690 = vmatpush.msra.mxu0 0.0
        %691 = vmatpush.msra.mxu0 0.0
        %692 = vmatpush.msra.mxu0 0.0
        %693 = vmatpush.msra.mxu0 %v463
        %694 = vmatmul.f32.gmra.mxu0 %v676
        %v695 = vpop.f32.mrf.mxu0
        %v696 = vadd.f32 0.0, %v695
        %697 = vdwg.mxu0
        %v699 = vsel %vm472, %v648, 0
        %v702 = vsel %vm472, %v672, 0
        %704 = vmatpush.xpose.msra.mxu0 0.0
        %705 = vmatpush.xpose.msra.mxu0 0.0
        %706 = vmatpush.xpose.msra.mxu0 0.0
        %707 = vmatpush.xpose.msra.mxu0 0.0
        %708 = vmatpush.xpose.msra.mxu0 0.0
        %709 = vmatpush.xpose.msra.mxu0 0.0
        %710 = vmatpush.xpose.msra.mxu0 0.0
        %711 = vmatpush.xpose.msra.mxu0 0.0
        %712 = vmatpush.xpose.msra.mxu0 0.0
        %713 = vmatpush.xpose.msra.mxu0 0.0
        %714 = vmatpush.xpose.msra.mxu0 0.0
        %715 = vmatpush.xpose.msra.mxu0 0.0
        %716 = vmatpush.xpose.msra.mxu0 0.0
        %717 = vmatpush.xpose.msra.mxu0 0.0
        %718 = vmatpush.xpose.msra.mxu0 0.0
        %719 = vmatpush.xpose.msra.mxu0 %v702
        %720 = vmatmul.f32.gmra.mxu0 %v699
        %v721 = vpop.f32.mrf.mxu0
        %v722 = vadd.f32 0.0, %v721
        %723 = vdwg.mxu0
        %v724 = vsel %vm472, %v722, -inf
        %725 = vmax.xlane.f32.xlu0 %v724
        %v726 = vpop.xlane.xlu0 %725
        %v727 = vsub.f32 %v722, %v726
        %v728 = vmul.f32 %v727, 1.442695
        %v729 = vpow.pop %v728
        %v730 = vsel %vm472, %v729, 0.0
        %731 = vadd.xlane.f32.xlu0 %v730
        %v732 = vpop.xlane.xlu0 %731
        %v733 = vrcp.pop %v732
        %v734 = vmul.f32 %v729, %v733
        %v736 = vsel %vm472, %v734, 0
        %738 = vmatpush.msra.mxu0 0.0
        %739 = vmatpush.msra.mxu0 0.0
        %740 = vmatpush.msra.mxu0 0.0
        %741 = vmatpush.msra.mxu0 0.0
        %742 = vmatpush.msra.mxu0 0.0
        %743 = vmatpush.msra.mxu0 0.0
        %744 = vmatpush.msra.mxu0 0.0
        %745 = vmatpush.msra.mxu0 0.0
        %746 = vmatpush.msra.mxu0 0.0
        %747 = vmatpush.msra.mxu0 0.0
        %748 = vmatpush.msra.mxu0 0.0
        %749 = vmatpush.msra.mxu0 0.0
        %750 = vmatpush.msra.mxu0 0.0
        %751 = vmatpush.msra.mxu0 0.0
        %752 = vmatpush.msra.mxu0 0.0
        %753 = vmatpush.msra.mxu0 %v696
        %754 = vmatmul.f32.gmra.mxu0 %v736
        %v755 = vpop.f32.mrf.mxu0
        %v756 = vadd.f32 0.0, %v755
        %757 = vdwg.mxu0
        %v759 = vsel %vm472, %v756, 0
        %761 = vmatpush.msra.mxu0 0.0
        %762 = vmatpush.msra.mxu0 0.0
        %763 = vmatpush.msra.mxu0 0.0
        %764 = vmatpush.msra.mxu0 0.0
        %765 = vmatpush.msra.mxu0 0.0
        %766 = vmatpush.msra.mxu0 0.0
        %767 = vmatpush.msra.mxu0 0.0
        %768 = vmatpush.msra.mxu0 0.0
        %769 = vmatpush.msra.mxu0 0.0
        %770 = vmatpush.msra.mxu0 0.0
        %771 = vmatpush.msra.mxu0 0.0
        %772 = vmatpush.msra.mxu0 0.0
        %773 = vmatpush.msra.mxu0 0.0
        %774 = vmatpush.msra.mxu0 0.0
        %775 = vmatpush.msra.mxu0 0.0
        %776 = vmatpush.msra.mxu0 %v465
        %777 = vmatmul.f32.gmra.mxu0 %v759
        %v778 = vpop.f32.mrf.mxu0
        %v779 = vadd.f32 0.0, %v778
        %780 = vdwg.mxu0
        %v781 = vadd.f32 %v625, %v779
        %782 = vrot.lane.b32.xlu0 %v458, 112
        %v783 = vpop.permute.xlu0 %782
        %v784 = vsel %vm472, %v783, 0
        %786 = vmatpush.msra.mxu0 0.0
        %787 = vmatpush.msra.mxu0 0.0
        %788 = vmatpush.msra.mxu0 0.0
        %789 = vmatpush.msra.mxu0 0.0
        %790 = vmatpush.msra.mxu0 0.0
        %791 = vmatpush.msra.mxu0 0.0
        %792 = vmatpush.msra.mxu0 0.0
        %793 = vmatpush.msra.mxu0 0.0
        %794 = vmatpush.msra.mxu0 0.0
        %795 = vmatpush.msra.mxu0 0.0
        %796 = vmatpush.msra.mxu0 0.0
        %797 = vmatpush.msra.mxu0 0.0
        %798 = vmatpush.msra.mxu0 0.0
        %799 = vmatpush.msra.mxu0 0.0
        %800 = vmatpush.msra.mxu0 0.0
        %801 = vmatpush.msra.mxu0 %v461
        %802 = vmatmul.f32.gmra.mxu0 %v784
        %v803 = vpop.f32.mrf.mxu0
        %v804 = vadd.f32 0.0, %v803
        %805 = vdwg.mxu0
        %806 = vrot.lane.b32.xlu0 %v459, 112
        %v807 = vpop.permute.xlu0 %806
        %v808 = vsel %vm472, %v807, 0
        %810 = vmatpush.msra.mxu0 0.0
        %811 = vmatpush.msra.mxu0 0.0
        %812 = vmatpush.msra.mxu0 0.0
        %813 = vmatpush.msra.mxu0 0.0
        %814 = vmatpush.msra.mxu0 0.0
        %815 = vmatpush.msra.mxu0 0.0
        %816 = vmatpush.msra.mxu0 0.0
        %817 = vmatpush.msra.mxu0 0.0
        %818 = vmatpush.msra.mxu0 0.0
        %819 = vmatpush.msra.mxu0 0.0
        %820 = vmatpush.msra.mxu0 0.0
        %821 = vmatpush.msra.mxu0 0.0
        %822 = vmatpush.msra.mxu0 0.0
        %823 = vmatpush.msra.mxu0 0.0
        %824 = vmatpush.msra.mxu0 0.0
        %825 = vmatpush.msra.mxu0 %v462
        %826 = vmatmul.f32.gmra.mxu0 %v808
        %v827 = vpop.f32.mrf.mxu0
        %v828 = vadd.f32 0.0, %v827
        %829 = vdwg.mxu0
        %830 = vrot.lane.b32.xlu0 %v460, 112
        %v831 = vpop.permute.xlu0 %830
        %v832 = vsel %vm472, %v831, 0
        %834 = vmatpush.msra.mxu0 0.0
        %835 = vmatpush.msra.mxu0 0.0
        %836 = vmatpush.msra.mxu0 0.0
        %837 = vmatpush.msra.mxu0 0.0
        %838 = vmatpush.msra.mxu0 0.0
        %839 = vmatpush.msra.mxu0 0.0
        %840 = vmatpush.msra.mxu0 0.0
        %841 = vmatpush.msra.mxu0 0.0
        %842 = vmatpush.msra.mxu0 0.0
        %843 = vmatpush.msra.mxu0 0.0
        %844 = vmatpush.msra.mxu0 0.0
        %845 = vmatpush.msra.mxu0 0.0
        %846 = vmatpush.msra.mxu0 0.0
        %847 = vmatpush.msra.mxu0 0.0
        %848 = vmatpush.msra.mxu0 0.0
        %849 = vmatpush.msra.mxu0 %v463
        %850 = vmatmul.f32.gmra.mxu0 %v832
        %v851 = vpop.f32.mrf.mxu0
        %v852 = vadd.f32 0.0, %v851
        %853 = vdwg.mxu0
        %v855 = vsel %vm472, %v804, 0
        %v858 = vsel %vm472, %v828, 0
        %860 = vmatpush.xpose.msra.mxu0 0.0
        %861 = vmatpush.xpose.msra.mxu0 0.0
        %862 = vmatpush.xpose.msra.mxu0 0.0
        %863 = vmatpush.xpose.msra.mxu0 0.0
        %864 = vmatpush.xpose.msra.mxu0 0.0
        %865 = vmatpush.xpose.msra.mxu0 0.0
        %866 = vmatpush.xpose.msra.mxu0 0.0
        %867 = vmatpush.xpose.msra.mxu0 0.0
        %868 = vmatpush.xpose.msra.mxu0 0.0
        %869 = vmatpush.xpose.msra.mxu0 0.0
        %870 = vmatpush.xpose.msra.mxu0 0.0
        %871 = vmatpush.xpose.msra.mxu0 0.0
        %872 = vmatpush.xpose.msra.mxu0 0.0
        %873 = vmatpush.xpose.msra.mxu0 0.0
        %874 = vmatpush.xpose.msra.mxu0 0.0
        %875 = vmatpush.xpose.msra.mxu0 %v858
        %876 = vmatmul.f32.gmra.mxu0 %v855
        %v877 = vpop.f32.mrf.mxu0
        %v878 = vadd.f32 0.0, %v877
        %879 = vdwg.mxu0
        %v880 = vsel %vm472, %v878, -inf
        %881 = vmax.xlane.f32.xlu0 %v880
        %v882 = vpop.xlane.xlu0 %881
        %v883 = vsub.f32 %v878, %v882
        %v884 = vmul.f32 %v883, 1.442695
        %v885 = vpow.pop %v884
        %v886 = vsel %vm472, %v885, 0.0
        %887 = vadd.xlane.f32.xlu0 %v886
        %v888 = vpop.xlane.xlu0 %887
        %v889 = vrcp.pop %v888
        %v890 = vmul.f32 %v885, %v889
        %v892 = vsel %vm472, %v890, 0
        %894 = vmatpush.msra.mxu0 0.0
        %895 = vmatpush.msra.mxu0 0.0
        %896 = vmatpush.msra.mxu0 0.0
        %897 = vmatpush.msra.mxu0 0.0
        %898 = vmatpush.msra.mxu0 0.0
        %899 = vmatpush.msra.mxu0 0.0
        %900 = vmatpush.msra.mxu0 0.0
        %901 = vmatpush.msra.mxu0 0.0
        %902 = vmatpush.msra.mxu0 0.0
        %903 = vmatpush.msra.mxu0 0.0
        %904 = vmatpush.msra.mxu0 0.0
        %905 = vmatpush.msra.mxu0 0.0
        %906 = vmatpush.msra.mxu0 0.0
        %907 = vmatpush.msra.mxu0 0.0
        %908 = vmatpush.msra.mxu0 0.0
        %909 = vmatpush.msra.mxu0 %v852
        %910 = vmatmul.f32.gmra.mxu0 %v892
        %v911 = vpop.f32.mrf.mxu0
        %v912 = vadd.f32 0.0, %v911
        %913 = vdwg.mxu0
        %v915 = vsel %vm472, %v912, 0
        %917 = vmatpush.msra.mxu0 0.0
        %918 = vmatpush.msra.mxu0 0.0
        %919 = vmatpush.msra.mxu0 0.0
        %920 = vmatpush.msra.mxu0 0.0
        %921 = vmatpush.msra.mxu0 0.0
        %922 = vmatpush.msra.mxu0 0.0
        %923 = vmatpush.msra.mxu0 0.0
        %924 = vmatpush.msra.mxu0 0.0
        %925 = vmatpush.msra.mxu0 0.0
        %926 = vmatpush.msra.mxu0 0.0
        %927 = vmatpush.msra.mxu0 0.0
        %928 = vmatpush.msra.mxu0 0.0
        %929 = vmatpush.msra.mxu0 0.0
        %930 = vmatpush.msra.mxu0 0.0
        %931 = vmatpush.msra.mxu0 0.0
        %932 = vmatpush.msra.mxu0 %v466
        %933 = vmatmul.f32.gmra.mxu0 %v915
        %v934 = vpop.f32.mrf.mxu0
        %v935 = vadd.f32 0.0, %v934
        %936 = vdwg.mxu0
        %v937 = vadd.f32 %v781, %v935
        %938 = vrot.lane.b32.xlu0 %v458, 104
        %v939 = vpop.permute.xlu0 %938
        %v940 = vsel %vm472, %v939, 0
        %942 = vmatpush.msra.mxu0 0.0
        %943 = vmatpush.msra.mxu0 0.0
        %944 = vmatpush.msra.mxu0 0.0
        %945 = vmatpush.msra.mxu0 0.0
        %946 = vmatpush.msra.mxu0 0.0
        %947 = vmatpush.msra.mxu0 0.0
        %948 = vmatpush.msra.mxu0 0.0
        %949 = vmatpush.msra.mxu0 0.0
        %950 = vmatpush.msra.mxu0 0.0
        %951 = vmatpush.msra.mxu0 0.0
        %952 = vmatpush.msra.mxu0 0.0
        %953 = vmatpush.msra.mxu0 0.0
        %954 = vmatpush.msra.mxu0 0.0
        %955 = vmatpush.msra.mxu0 0.0
        %956 = vmatpush.msra.mxu0 0.0
        %957 = vmatpush.msra.mxu0 %v461
        %958 = vmatmul.f32.gmra.mxu0 %v940
        %v959 = vpop.f32.mrf.mxu0
        %v960 = vadd.f32 0.0, %v959
        %961 = vdwg.mxu0
        %962 = vrot.lane.b32.xlu0 %v459, 104
        %v963 = vpop.permute.xlu0 %962
        %v964 = vsel %vm472, %v963, 0
        %966 = vmatpush.msra.mxu0 0.0
        %967 = vmatpush.msra.mxu0 0.0
        %968 = vmatpush.msra.mxu0 0.0
        %969 = vmatpush.msra.mxu0 0.0
        %970 = vmatpush.msra.mxu0 0.0
        %971 = vmatpush.msra.mxu0 0.0
        %972 = vmatpush.msra.mxu0 0.0
        %973 = vmatpush.msra.mxu0 0.0
        %974 = vmatpush.msra.mxu0 0.0
        %975 = vmatpush.msra.mxu0 0.0
        %976 = vmatpush.msra.mxu0 0.0
        %977 = vmatpush.msra.mxu0 0.0
        %978 = vmatpush.msra.mxu0 0.0
        %979 = vmatpush.msra.mxu0 0.0
        %980 = vmatpush.msra.mxu0 0.0
        %981 = vmatpush.msra.mxu0 %v462
        %982 = vmatmul.f32.gmra.mxu0 %v964
        %v983 = vpop.f32.mrf.mxu0
        %v984 = vadd.f32 0.0, %v983
        %985 = vdwg.mxu0
        %986 = vrot.lane.b32.xlu0 %v460, 104
        %v987 = vpop.permute.xlu0 %986
        %v988 = vsel %vm472, %v987, 0
        %990 = vmatpush.msra.mxu0 0.0
        %991 = vmatpush.msra.mxu0 0.0
        %992 = vmatpush.msra.mxu0 0.0
        %993 = vmatpush.msra.mxu0 0.0
        %994 = vmatpush.msra.mxu0 0.0
        %995 = vmatpush.msra.mxu0 0.0
        %996 = vmatpush.msra.mxu0 0.0
        %997 = vmatpush.msra.mxu0 0.0
        %998 = vmatpush.msra.mxu0 0.0
        %999 = vmatpush.msra.mxu0 0.0
        %1000 = vmatpush.msra.mxu0 0.0
        %1001 = vmatpush.msra.mxu0 0.0
        %1002 = vmatpush.msra.mxu0 0.0
        %1003 = vmatpush.msra.mxu0 0.0
        %1004 = vmatpush.msra.mxu0 0.0
        %1005 = vmatpush.msra.mxu0 %v463
        %1006 = vmatmul.f32.gmra.mxu0 %v988
        %v1007 = vpop.f32.mrf.mxu0
        %v1008 = vadd.f32 0.0, %v1007
        %1009 = vdwg.mxu0
        %v1011 = vsel %vm472, %v960, 0
        %v1014 = vsel %vm472, %v984, 0
        %1016 = vmatpush.xpose.msra.mxu0 0.0
        %1017 = vmatpush.xpose.msra.mxu0 0.0
        %1018 = vmatpush.xpose.msra.mxu0 0.0
        %1019 = vmatpush.xpose.msra.mxu0 0.0
        %1020 = vmatpush.xpose.msra.mxu0 0.0
        %1021 = vmatpush.xpose.msra.mxu0 0.0
        %1022 = vmatpush.xpose.msra.mxu0 0.0
        %1023 = vmatpush.xpose.msra.mxu0 0.0
        %1024 = vmatpush.xpose.msra.mxu0 0.0
        %1025 = vmatpush.xpose.msra.mxu0 0.0
        %1026 = vmatpush.xpose.msra.mxu0 0.0
        %1027 = vmatpush.xpose.msra.mxu0 0.0
        %1028 = vmatpush.xpose.msra.mxu0 0.0
        %1029 = vmatpush.xpose.msra.mxu0 0.0
        %1030 = vmatpush.xpose.msra.mxu0 0.0
        %1031 = vmatpush.xpose.msra.mxu0 %v1014
        %1032 = vmatmul.f32.gmra.mxu0 %v1011
        %v1033 = vpop.f32.mrf.mxu0
        %v1034 = vadd.f32 0.0, %v1033
        %1035 = vdwg.mxu0
        %v1036 = vsel %vm472, %v1034, -inf
        %1037 = vmax.xlane.f32.xlu0 %v1036
        %v1038 = vpop.xlane.xlu0 %1037
        %v1039 = vsub.f32 %v1034, %v1038
        %v1040 = vmul.f32 %v1039, 1.442695
        %v1041 = vpow.pop %v1040
        %v1042 = vsel %vm472, %v1041, 0.0
        %1043 = vadd.xlane.f32.xlu0 %v1042
        %v1044 = vpop.xlane.xlu0 %1043
        %v1045 = vrcp.pop %v1044
        %v1046 = vmul.f32 %v1041, %v1045
        %v1048 = vsel %vm472, %v1046, 0
        %1050 = vmatpush.msra.mxu0 0.0
        %1051 = vmatpush.msra.mxu0 0.0
        %1052 = vmatpush.msra.mxu0 0.0
        %1053 = vmatpush.msra.mxu0 0.0
        %1054 = vmatpush.msra.mxu0 0.0
        %1055 = vmatpush.msra.mxu0 0.0
        %1056 = vmatpush.msra.mxu0 0.0
        %1057 = vmatpush.msra.mxu0 0.0
        %1058 = vmatpush.msra.mxu0 0.0
        %1059 = vmatpush.msra.mxu0 0.0
        %1060 = vmatpush.msra.mxu0 0.0
        %1061 = vmatpush.msra.mxu0 0.0
        %1062 = vmatpush.msra.mxu0 0.0
        %1063 = vmatpush.msra.mxu0 0.0
        %1064 = vmatpush.msra.mxu0 0.0
        %1065 = vmatpush.msra.mxu0 %v1008
        %1066 = vmatmul.f32.gmra.mxu0 %v1048
        %v1067 = vpop.f32.mrf.mxu0
        %v1068 = vadd.f32 0.0, %v1067
        %1069 = vdwg.mxu0
        %v1071 = vsel %vm472, %v1068, 0
        %1073 = vmatpush.msra.mxu0 0.0
        %1074 = vmatpush.msra.mxu0 0.0
        %1075 = vmatpush.msra.mxu0 0.0
        %1076 = vmatpush.msra.mxu0 0.0
        %1077 = vmatpush.msra.mxu0 0.0
        %1078 = vmatpush.msra.mxu0 0.0
        %1079 = vmatpush.msra.mxu0 0.0
        %1080 = vmatpush.msra.mxu0 0.0
        %1081 = vmatpush.msra.mxu0 0.0
        %1082 = vmatpush.msra.mxu0 0.0
        %1083 = vmatpush.msra.mxu0 0.0
        %1084 = vmatpush.msra.mxu0 0.0
        %1085 = vmatpush.msra.mxu0 0.0
        %1086 = vmatpush.msra.mxu0 0.0
        %1087 = vmatpush.msra.mxu0 0.0
        %1088 = vmatpush.msra.mxu0 %v467
        %1089 = vmatmul.f32.gmra.mxu0 %v1071
        %v1090 = vpop.f32.mrf.mxu0
        %v1091 = vadd.f32 0.0, %v1090
        %1092 = vdwg.mxu0
        %v1093 = vadd.f32 %v937, %v1091
        %vm1094 = vcmask 261120
        %1095 = vst.msk [vmem:[%s457] sm:$0xff] %vm1094, %v1093
        %s1096 = sand.u32 %s221, 1
        %s1097 = scalar_lea.sflag [#allocation4], %s1096
        %s1098 = sand.u32 %s221, 1
        %s1099 = smul.addr %s1098, 8
        %s1100 = scalar_lea.vmem [#allocation14], %s1099
        // Predicated region
        $region81: #{tpu_custom_call.1} parent=51 // pred_check
          %p1101 = pneg %p231
        $region82: #{tpu_custom_call.1} parent=51 // pred_check_branch
          %1103 = sbr.rel (%p1101) target = $region84
        $region83: #{tpu_custom_call.1} parent=51 // pred_region
          %1105 = vsyncadd %s1097, 0
          %s1106 = smul.addr %s30, 8
          %s1107 = scalar_lea.hbm %s8, %s1106
          %s1109 = sshll.u32 %s1100, 4
          %s1110 = int_to_ptr.vmem [resolvable:$true] %s1109
          %s1111 = sshll.u32 %s1107, 4
          %s1112 = int_to_ptr.hbm [resolvable:$true] %s1111
          %1114 = dma.vmem_to_hbm [thread:$0]  %s1110, 128, %s1112, %s1097
        $region84: #{tpu_custom_call.1} parent=51 // pred_fallthru
          _
      $region52: #{tpu_custom_call.1} parent=5 // pred_fallthru
        _
      %p1115 = scmp.le.s32.totalorder 2, %s25
      // Predicated region
      $region85: #{tpu_custom_call.1} parent=5 // pred_check
        %p1116 = pneg %p1115
      $region86: #{tpu_custom_call.1} parent=5 // pred_check_branch
        %1118 = sbr.rel (%p1116) target = $region88
      $region87: #{tpu_custom_call.1} parent=5 // pred_region
        %s1119 = ssub.s32 %s25, 2
        // Predicated region
        $region89: #{tpu_custom_call.1} parent=87 // pred_check
          %p1120 = pneg %p237
        $region90: #{tpu_custom_call.1} parent=87 // pred_check_branch
          %1122 = sbr.rel (%p1120) target = $region92
        $region91: #{tpu_custom_call.1} parent=87 // pred_region
          %s1123 = sand.u32 %s222, 1
          %s1124 = scalar_lea.sflag [#allocation4], %s1123
          %s1125 = sand.u32 %s222, 1
          %s1126 = smul.addr %s1125, 8
          %s1127 = scalar_lea.vmem [#allocation14], %s1126
          %1129 = dma.done %s1124, 128
        $region92: #{tpu_custom_call.1} parent=87 // pred_fallthru
          _
      $region88: #{tpu_custom_call.1} parent=5 // pred_fallthru
        _
    $region6: #{tpu_custom_call.1} parent=1 // loop_footer
      %s29 = sadd.s32 1, %s25
    $region7: #{tpu_custom_call.1} parent=1 // loop_footer_branch
      %24 = sbr.rel target = $region3
    $region8: #{tpu_custom_call.1} parent=1 // loop_exit
      _
    %1130 = vsyncpa [#allocation3], 1
    %s1131 = scalar_lea.sflag [#allocation3], 1
    %1132 = vsyncpa %s1131, 1
    %1133 = vsyncpa [#allocation6], 1
    %s1134 = scalar_lea.sflag [#allocation6], 1
    %1135 = vsyncpa %s1134, 1
    %1136 = vsyncpa [#allocation9], 1
    %1137 = vsyncpa [#allocation12], 1
    %1138 = vsyncpa [#allocation4], 1
    %s1139 = scalar_lea.sflag [#allocation4], 1
    %1140 = vsyncpa %s1139, 1

</llo_original>
